<compile_context>
chip_gen: v7x
topology: tpu7x:2x2x1
jax: 0.10.0
libtpu: 0.0.40
codegen_flags: <defaults>
</compile_context>

<pallas_src>
import functools

import jax
import jax.numpy as jnp
from jax.experimental import pallas as pl
from jax.experimental.pallas import tpu as pltpu


def _round_up(x, m):
    return ((x + m - 1) // m) * m


def _choose_batch_tile(B, cap):
    """Batch tile: >=4 grid blocks at large B (v7x dual-TC), 16-row granularity
    for bf16 sublane packing, capped by `cap` for VMEM budget."""
    tb = _round_up(max((B + 3) // 4, 1), 256)   # aim for >= 4 blocks
    tb = min(tb, cap)
    tb = min(tb, _round_up(B, 16))              # don't exceed (rounded) batch
    return max(tb, 16)


def mlp_kernel(x_ref, w1_ref, b1_ref, w2_ref, b2_ref, o_ref):
    # x_ref: (TB, D) f32   w1_ref: (D, Hp) bf16   b1_ref: (1, Hp) f32
    # w2_ref: (Hp, D) bf16  b2_ref: (1, D) f32    o_ref: (TB, D) f32
    # bf16 operands on the MXU with f32 accumulation; bias/ReLU on the VPU.
    x = x_ref[...].astype(jnp.bfloat16)
    h = jnp.dot(x, w1_ref[...], preferred_element_type=jnp.float32) + b1_ref[...]
    h = jnp.maximum(h, 0.0)
    y = jnp.dot(h.astype(jnp.bfloat16), w2_ref[...],
                preferred_element_type=jnp.float32) + b2_ref[...]
    o_ref[...] = jnp.maximum(y, 0.0).astype(o_ref.dtype)


@functools.partial(
    jax.jit, static_argnames=("window_length", "in_channels", "batch_tile"))
def mlp_forward(x, w1, b1, w2, b2, *, window_length, in_channels,
                batch_tile=2048):
    """x: (B, C, W) float32. w1: (D, H), b1: (H,), w2: (H, D), b2: (D,)."""
    B = x.shape[0]
    D = window_length * in_channels
    H = w1.shape[1]
    Hp = _round_up(H, 128)  # pad hidden dim to a full 128-lane vreg (exact)

    x_flat = x.reshape(B, D)  # row-major view == torch.nn.Flatten

    # Zero-pad hidden dimension and pre-cast weights to bf16 once (hoisted out
    # of the sequential grid loop). Padded columns are 0 after bias+ReLU and the
    # padded rows of w2 are 0, so the result matches H=30 exactly.
    w1_p = jnp.zeros((D, Hp), jnp.bfloat16).at[:, :H].set(w1.astype(jnp.bfloat16))
    w2_p = jnp.zeros((Hp, D), jnp.bfloat16).at[:H, :].set(w2.astype(jnp.bfloat16))
    b1_p = jnp.zeros((1, Hp), jnp.float32).at[0, :H].set(b1)
    b2_p = b2.reshape(1, D).astype(jnp.float32)

    tb = _choose_batch_tile(B, batch_tile)

    out_flat = pl.pallas_call(
        mlp_kernel,
        out_shape=jax.ShapeDtypeStruct((B, D), jnp.float32),
        grid=(pl.cdiv(B, tb),),
        in_specs=[
            pl.BlockSpec((tb, D), lambda i: (i, 0)),   # x: pipelined batch tiles
            pl.BlockSpec((D, Hp), lambda i: (0, 0)),   # weights: VMEM-resident
            pl.BlockSpec((1, Hp), lambda i: (0, 0)),
            pl.BlockSpec((Hp, D), lambda i: (0, 0)),
            pl.BlockSpec((1, D), lambda i: (0, 0)),
        ],
        out_specs=pl.BlockSpec((tb, D), lambda i: (i, 0)),
        compiler_params=pltpu.CompilerParams(
            dimension_semantics=("parallel",),      # shard batch blocks across TCs
            vmem_limit_bytes=64 * 1024 * 1024),     # v5e scoped default is 16 MiB
    )(x_flat, w1_p, b1_p, w2_p, b2_p)

    # torch.reshape(x, (-1, in_channels, window_length))
    return out_flat.reshape(-1, in_channels, window_length)


def init_params(key, window_length, in_channels, hidden=30):
    """Deterministic init mimicking nn.Linear default (uniform +-1/sqrt(fan_in))."""
    D = window_length * in_channels
    k1, k2, k3, k4 = jax.random.split(key, 4)
    bound1 = 1.0 / jnp.sqrt(D)
    bound2 = 1.0 / jnp.sqrt(hidden)
    # Stored transposed relative to torch (torch: (out, in); here: (in, out)).
    w1 = jax.random.uniform(k1, (D, hidden), jnp.float32, -bound1, bound1)
    b1 = jax.random.uniform(k2, (hidden,), jnp.float32, -bound1, bound1)
    w2 = jax.random.uniform(k3, (hidden, D), jnp.float32, -bound2, bound2)
    b2 = jax.random.uniform(k4, (D,), jnp.float32, -bound2, bound2)
    return w1, b1, w2, b2


if __name__ == "__main__":
    window_length = 64
    in_channels = 3
    batch = 8

    key = jax.random.PRNGKey(0)
    kx, kp = jax.random.split(key)
    x = jax.random.normal(kx, (batch, in_channels, window_length), jnp.float32)
    w1, b1, w2, b2 = init_params(kp, window_length, in_channels)

    out = mlp_forward(x, w1, b1, w2, b2,
                      window_length=window_length, in_channels=in_channels)
    out = jax.block_until_ready(out)

    # Pure-JAX f32 reference. Kernel uses bf16 MXU operands with f32 accumulation,
    # so tolerance is loosened accordingly.
    ref = jnp.maximum(
        jnp.maximum(x.reshape(batch, -1) @ w1 + b1, 0.0) @ w2 + b2, 0.0
    ).reshape(-1, in_channels, window_length)
    assert out.shape == (batch, in_channels, window_length)
    assert jnp.allclose(out, ref, atol=5e-2, rtol=5e-2), "mismatch vs reference"

    print("KERNEL_OK")
</pallas_src>

<mosaic_0001>
module attributes {stable_mosaic.version = 11 : i64} {
  func.func @mlp_kernel(%arg0: i32, %arg1: memref<16x192xf32, #tpu.memory_space<vmem>>, %arg2: memref<192x128xbf16, #tpu.memory_space<vmem>>, %arg3: memref<1x128xf32, #tpu.memory_space<vmem>>, %arg4: memref<128x192xbf16, #tpu.memory_space<vmem>>, %arg5: memref<1x192xf32, #tpu.memory_space<vmem>>, %arg6: memref<16x192xf32, #tpu.memory_space<vmem>>) attributes {dimension_semantics = [#tpu.dimension_semantics<parallel>], iteration_bounds = array<i64: 1>, scalar_prefetch = 0 : i64, scratch_operands = 0 : i64, tpu.core_type = #tpu.core_type<tc>, window_params = [{transform_indices = @transform_0, window_bounds = array<i64: 16, 192>}, {pipeline_mode = #tpu.pipeline_mode<synchronous>, transform_indices = @transform_1, window_bounds = array<i64: 192, 128>}, {pipeline_mode = #tpu.pipeline_mode<synchronous>, transform_indices = @transform_2, window_bounds = array<i64: 1, 128>}, {pipeline_mode = #tpu.pipeline_mode<synchronous>, transform_indices = @transform_3, window_bounds = array<i64: 128, 192>}, {pipeline_mode = #tpu.pipeline_mode<synchronous>, transform_indices = @transform_4, window_bounds = array<i64: 1, 192>}, {transform_indices = @transform_5, window_bounds = array<i64: 16, 192>}]} {
    %c0 = arith.constant 0 : index
    %c0_0 = arith.constant 0 : index
    %0 = vector.load %arg1[%c0, %c0_0] : memref<16x192xf32, #tpu.memory_space<vmem>>, vector<16x192xf32>
    %1 = arith.truncf %0 : vector<16x192xf32> to vector<16x192xbf16>
    %c0_1 = arith.constant 0 : index
    %c0_2 = arith.constant 0 : index
    %2 = vector.load %arg2[%c0_1, %c0_2] : memref<192x128xbf16, #tpu.memory_space<vmem>>, vector<192x128xbf16>
    %cst = arith.constant dense<0.000000e+00> : vector<16x128xf32>
    %3 = tpu.matmul %1, %2, %cst {dimension_numbers = #tpu.dot_dimension_numbers<[1], [0], [0], [1], [0, 0, 1, 1], [], []>} : vector<16x192xbf16>, vector<192x128xbf16>, vector<16x128xf32> -> vector<16x128xf32>
    %c0_3 = arith.constant 0 : index
    %c0_4 = arith.constant 0 : index
    %4 = vector.load %arg3[%c0_3, %c0_4] : memref<1x128xf32, #tpu.memory_space<vmem>>, vector<1x128xf32>
    %5 = vector.broadcast %4 : vector<1x128xf32> to vector<16x128xf32>
    %6 = arith.addf %3, %5 : vector<16x128xf32>
    %cst_5 = arith.constant 0.000000e+00 : f32
    %7 = vector.broadcast %cst_5 : f32 to vector<16x128xf32>
    %8 = arith.maximumf %6, %7 : vector<16x128xf32>
    %9 = arith.truncf %8 : vector<16x128xf32> to vector<16x128xbf16>
    %c0_6 = arith.constant 0 : index
    %c0_7 = arith.constant 0 : index
    %10 = vector.load %arg4[%c0_6, %c0_7] : memref<128x192xbf16, #tpu.memory_space<vmem>>, vector<128x192xbf16>
    %cst_8 = arith.constant dense<0.000000e+00> : vector<16x192xf32>
    %11 = tpu.matmul %9, %10, %cst_8 {dimension_numbers = #tpu.dot_dimension_numbers<[1], [0], [0], [1], [0, 0, 1, 1], [], []>} : vector<16x128xbf16>, vector<128x192xbf16>, vector<16x192xf32> -> vector<16x192xf32>
    %c0_9 = arith.constant 0 : index
    %c0_10 = arith.constant 0 : index
    %12 = vector.load %arg5[%c0_9, %c0_10] : memref<1x192xf32, #tpu.memory_space<vmem>>, vector<1x192xf32>
    %13 = vector.broadcast %12 : vector<1x192xf32> to vector<16x192xf32>
    %14 = arith.addf %11, %13 : vector<16x192xf32>
    %cst_11 = arith.constant 0.000000e+00 : f32
    %15 = vector.broadcast %cst_11 : f32 to vector<16x192xf32>
    %16 = arith.maximumf %14, %15 : vector<16x192xf32>
    %c0_12 = arith.constant 0 : index
    %c0_13 = arith.constant 0 : index
    %17 = vector.load %arg6[%c0_12, %c0_13] : memref<16x192xf32, #tpu.memory_space<vmem>>, vector<16x192xf32>
    tpu.vector_store %arg6[%c0_12, %c0_13], %16 {strides = array<i32>} : memref<16x192xf32, #tpu.memory_space<vmem>>, vector<16x192xf32>,
    return
  }
  func.func @transform_0(%arg0: i32) -> (i32, i32) {
    %c0_i32 = arith.constant 0 : i32
    %c0_i32_0 = arith.constant 0 : i32
    return %arg0, %c0_i32 : i32, i32
  }
  func.func @transform_1(%arg0: i32) -> (i32, i32) {
    %c0_i32 = arith.constant 0 : i32
    %c0_i32_0 = arith.constant 0 : i32
    %c0_i32_1 = arith.constant 0 : i32
    return %c0_i32, %c0_i32_0 : i32, i32
  }
  func.func @transform_2(%arg0: i32) -> (i32, i32) {
    %c0_i32 = arith.constant 0 : i32
    %c0_i32_0 = arith.constant 0 : i32
    %c0_i32_1 = arith.constant 0 : i32
    return %c0_i32, %c0_i32_0 : i32, i32
  }
  func.func @transform_3(%arg0: i32) -> (i32, i32) {
    %c0_i32 = arith.constant 0 : i32
    %c0_i32_0 = arith.constant 0 : i32
    %c0_i32_1 = arith.constant 0 : i32
    return %c0_i32, %c0_i32_0 : i32, i32
  }
  func.func @transform_4(%arg0: i32) -> (i32, i32) {
    %c0_i32 = arith.constant 0 : i32
    %c0_i32_0 = arith.constant 0 : i32
    %c0_i32_1 = arith.constant 0 : i32
    return %c0_i32, %c0_i32_0 : i32, i32
  }
  func.func @transform_5(%arg0: i32) -> (i32, i32) {
    %c0_i32 = arith.constant 0 : i32
    %c0_i32_0 = arith.constant 0 : i32
    return %arg0, %c0_i32 : i32, i32
  }
}

</mosaic_0001>

<llo_original>
// kernel: mlp_forward.1
$region0: #{mlp_forward.1}
  #allocation0 [shape = 'u32[]', space=smem, size = 0x4, offset = 0x4, fixed_abs, tag = 'smem constant byte address 0x4 - core index']
  #allocation1 [shape = 'u32[144,128]{1,0:T(1,128)}', space=vmem, size = 0x12000, scoped, tag = 'internal scratch']
  %s0 = inlined_call_operand.hbm [shape: f32[8,192], index: 0, kind: input, shape index: {}]
  %s1 = inlined_call_operand.hbm [shape: bf16[192,128], index: 1, kind: input, shape index: {}]
  %s2 = inlined_call_operand.hbm [shape: f32[1,128], index: 2, kind: input, shape index: {}]
  %s3 = inlined_call_operand.hbm [shape: bf16[128,192], index: 3, kind: input, shape index: {}]
  %s4 = inlined_call_operand.hbm [shape: f32[1,192], index: 4, kind: input, shape index: {}]
  %s5 = inlined_call_operand.hbm [shape: f32[8,192], index: 5, kind: output, shape index: {}]
  %s6 = sld [smem:[#allocation0]]
  $region50: #{mlp_forward.1} parent=0
    _
  %s8 = ssub.s32 1, %s6
  %s9 = scalar_select 0, %s8, %s6
  $region1: #{mlp_forward.1} parent=0
    #allocation2 [shape = 'u8[16384]{0}', space=vmem, size = 0x4000, scoped, tag = 'input window, operand 0, single buffered']
    #allocation3 [shape = 's32[1]{0}', space=sflag, size = 0x4, scoped, tag = 'scoped memory for mlp_forward.1']
    #allocation4 [shape = 's32[1]{0}', space=sflag, size = 0x4, scoped, tag = 'scoped memory for mlp_forward.1']
    #allocation5 [shape = 'u8[49152]{0}', space=vmem, size = 0xc000, scoped, tag = 'input window, operand 1, single buffered']
    #allocation6 [shape = 's32[1]{0}', space=sflag, size = 0x4, scoped, tag = 'scoped memory for mlp_forward.1']
    #allocation7 [shape = 'u8[512]{0}', space=vmem, size = 0x400, scoped, tag = 'input window, operand 2, single buffered']
    #allocation8 [shape = 'u8[65536]{0}', space=vmem, size = 0x10000, scoped, tag = 'input window, operand 3, single buffered']
    #allocation9 [shape = 's32[1]{0}', space=sflag, size = 0x4, scoped, tag = 'scoped memory for mlp_forward.1']
    #allocation10 [shape = 'u8[1024]{0}', space=vmem, size = 0x400, scoped, tag = 'input window, operand 4, single buffered']
    #allocation11 [shape = 'u8[16384]{0}', space=vmem, size = 0x4000, scoped, tag = 'output window, operand 0, single buffered']
    %10 = vsyncpa [#allocation3], 0
    %11 = vsyncpa [#allocation6], 0
    %12 = vsyncpa [#allocation9], 0
    %13 = vsyncpa [#allocation4], 0
    // Predicated region
    $region2: #{mlp_forward.1} parent=1 // pred_check
      _
    $region3: #{mlp_forward.1} parent=1 // pred_check_branch
      %15 = sbr.rel (0) target = $region5
    $region4: #{mlp_forward.1} parent=1 // pred_region
      %s17 = ssub.s32 512, 256
      %18 = vsyncadd [#allocation3], %s17
      %s19 = sshll.u32 [#allocation2], 4
      %s20 = int_to_ptr.vmem [resolvable:$true] %s19
      %25 = dma.hbm_to_vmem [thread:$0]  %s0, 256, %s20, [#allocation3], 256, 256, 16
    $region5: #{mlp_forward.1} parent=1 // pred_fallthru
      _
    // Predicated region
    $region6: #{mlp_forward.1} parent=1 // pred_check
      _
    $region7: #{mlp_forward.1} parent=1 // pred_check_branch
      %27 = sbr.rel (0) target = $region9
    $region8: #{mlp_forward.1} parent=1 // pred_region
      %s29 = ssub.s32 1536, 1536
      %30 = vsyncadd [#allocation6], %s29
      %s31 = sshll.u32 [#allocation5], 4
      %s32 = int_to_ptr.vmem [resolvable:$true] %s31
      %37 = dma.hbm_to_vmem [thread:$0]  %s1, 1536, %s32, [#allocation6], 64, 64, 4
    $region9: #{mlp_forward.1} parent=1 // pred_fallthru
      _
    // Predicated region
    $region10: #{mlp_forward.1} parent=1 // pred_check
      _
    $region11: #{mlp_forward.1} parent=1 // pred_check_branch
      %39 = sbr.rel (0) target = $region13
    $region12: #{mlp_forward.1} parent=1 // pred_region
      %s41 = ssub.s32 16, 16
      %42 = vsyncadd [#allocation6], %s41
      %s44 = sshll.u32 [#allocation7], 4
      %s45 = int_to_ptr.vmem [resolvable:$true] %s44
      %47 = dma.hbm_to_vmem [thread:$0]  %s2, 16, %s45, [#allocation6]
    $region13: #{mlp_forward.1} parent=1 // pred_fallthru
      _
    // Predicated region
    $region14: #{mlp_forward.1} parent=1 // pred_check
      _
    $region15: #{mlp_forward.1} parent=1 // pred_check_branch
      %49 = sbr.rel (0) target = $region17
    $region16: #{mlp_forward.1} parent=1 // pred_region
      %s51 = ssub.s32 2048, 2048
      %52 = vsyncadd [#allocation9], %s51
      %s53 = sshll.u32 [#allocation8], 4
      %s54 = int_to_ptr.vmem [resolvable:$true] %s53
      %59 = dma.hbm_to_vmem [thread:$0]  %s3, 2048, %s54, [#allocation9], 128, 128, 8
    $region17: #{mlp_forward.1} parent=1 // pred_fallthru
      _
    // Predicated region
    $region18: #{mlp_forward.1} parent=1 // pred_check
      _
    $region19: #{mlp_forward.1} parent=1 // pred_check_branch
      %61 = sbr.rel (0) target = $region21
    $region20: #{mlp_forward.1} parent=1 // pred_region
      %s63 = ssub.s32 32, 32
      %64 = vsyncadd [#allocation9], %s63
      %s66 = sshll.u32 [#allocation10], 4
      %s67 = int_to_ptr.vmem [resolvable:$true] %s66
      %69 = dma.hbm_to_vmem [thread:$0]  %s4, 32, %s67, [#allocation9]
    $region21: #{mlp_forward.1} parent=1 // pred_fallthru
      _
    // Predicated region
    $region22: #{mlp_forward.1} parent=1 // pred_check
      _
    $region23: #{mlp_forward.1} parent=1 // pred_check_branch
      %71 = sbr.rel (0) target = $region25
    $region24: #{mlp_forward.1} parent=1 // pred_region
      %72 = dma.done [#allocation3], 512
    $region25: #{mlp_forward.1} parent=1 // pred_fallthru
      _
    // Predicated region
    $region26: #{mlp_forward.1} parent=1 // pred_check
      _
    $region27: #{mlp_forward.1} parent=1 // pred_check_branch
      %74 = sbr.rel (0) target = $region29
    $region28: #{mlp_forward.1} parent=1 // pred_region
      %75 = dma.done [#allocation6], 1536
    $region29: #{mlp_forward.1} parent=1 // pred_fallthru
      _
    // Predicated region
    $region30: #{mlp_forward.1} parent=1 // pred_check
      _
    $region31: #{mlp_forward.1} parent=1 // pred_check_branch
      %77 = sbr.rel (0) target = $region33
    $region32: #{mlp_forward.1} parent=1 // pred_region
      %78 = dma.done [#allocation6], 16
    $region33: #{mlp_forward.1} parent=1 // pred_fallthru
      _
    // Predicated region
    $region34: #{mlp_forward.1} parent=1 // pred_check
      _
    $region35: #{mlp_forward.1} parent=1 // pred_check_branch
      %80 = sbr.rel (0) target = $region37
    $region36: #{mlp_forward.1} parent=1 // pred_region
      %81 = dma.done [#allocation9], 2048
    $region37: #{mlp_forward.1} parent=1 // pred_fallthru
      _
    // Predicated region
    $region38: #{mlp_forward.1} parent=1 // pred_check
      _
    $region39: #{mlp_forward.1} parent=1 // pred_check_branch
      %83 = sbr.rel (0) target = $region41
    $region40: #{mlp_forward.1} parent=1 // pred_region
      %84 = dma.done [#allocation9], 32
    $region41: #{mlp_forward.1} parent=1 // pred_fallthru
      _
    %v86 = vld [vmem:[#allocation2] sm:$0xff]
    %v87 = vld [vmem:[#allocation2 + $0x8] sm:$0xff]
    %v88 = vld [vmem:[#allocation2 + $0x10] sm:$0xff]
    %v89 = vld [vmem:[#allocation2 + $0x18] sm:$0xff]
    %v90 = vpack.c.bf16 %v88, %v86
    %v91 = vpack.c.bf16 %v89, %v87
    %v92 = vld [vmem:[#allocation5] sm:$0xf]
    %v93 = vld [vmem:[#allocation5 + $0x4] sm:$0xf]
    %v94 = vld [vmem:[#allocation5 + $0x8] sm:$0xf]
    %v95 = vld [vmem:[#allocation5 + $0xc] sm:$0xf]
    %v96 = vld [vmem:[#allocation5 + $0x10] sm:$0xf]
    %v97 = vld [vmem:[#allocation5 + $0x14] sm:$0xf]
    %v98 = vld [vmem:[#allocation5 + $0x18] sm:$0xf]
    %v99 = vld [vmem:[#allocation5 + $0x1c] sm:$0xf]
    %v100 = vld [vmem:[#allocation5 + $0x20] sm:$0xf]
    %v101 = vld [vmem:[#allocation5 + $0x24] sm:$0xf]
    %v102 = vld [vmem:[#allocation5 + $0x28] sm:$0xf]
    %v103 = vld [vmem:[#allocation5 + $0x2c] sm:$0xf]
    %v104 = vld [vmem:[#allocation5 + $0x30] sm:$0xf]
    %v105 = vld [vmem:[#allocation5 + $0x34] sm:$0xf]
    %v106 = vld [vmem:[#allocation5 + $0x38] sm:$0xf]
    %v107 = vld [vmem:[#allocation5 + $0x3c] sm:$0xf]
    %v108 = vld [vmem:[#allocation5 + $0x40] sm:$0xf]
    %v109 = vld [vmem:[#allocation5 + $0x44] sm:$0xf]
    %v110 = vld [vmem:[#allocation5 + $0x48] sm:$0xf]
    %v111 = vld [vmem:[#allocation5 + $0x4c] sm:$0xf]
    %v112 = vld [vmem:[#allocation5 + $0x50] sm:$0xf]
    %v113 = vld [vmem:[#allocation5 + $0x54] sm:$0xf]
    %v114 = vld [vmem:[#allocation5 + $0x58] sm:$0xf]
    %v115 = vld [vmem:[#allocation5 + $0x5c] sm:$0xf]
    %v116 = vld [vmem:[#allocation7] sm:$0x1]
    %v118 = vlaneseq
    %v119 = vshrl.u32 %v118, 7
    %v120 = vsub.s32 0, %v119
    %v121 = vrot.slane %v116, %v120
    %v147 = vunpack.c.l.b16 %v92
    %v148 = vunpack.c.l.b16 %v93
    %v149 = vunpack.c.l.b16 %v94
    %v150 = vunpack.c.l.b16 %v95
    %v151 = vunpack.c.l.b16 %v96
    %v152 = vunpack.c.l.b16 %v97
    %v153 = vunpack.c.l.b16 %v98
    %v154 = vunpack.c.l.b16 %v99
    %v155 = vunpack.c.l.b16 %v100
    %v156 = vunpack.c.l.b16 %v101
    %v157 = vunpack.c.l.b16 %v102
    %v158 = vunpack.c.l.b16 %v103
    %v159 = vunpack.c.l.b16 %v104
    %v160 = vunpack.c.l.b16 %v105
    %v161 = vunpack.c.l.b16 %v106
    %v162 = vunpack.c.l.b16 %v107
    %v163 = vunpack.c.l.b16 %v108
    %v164 = vunpack.c.l.b16 %v109
    %v165 = vunpack.c.l.b16 %v110
    %v166 = vunpack.c.l.b16 %v111
    %v167 = vunpack.c.l.b16 %v112
    %v168 = vunpack.c.l.b16 %v113
    %v169 = vunpack.c.l.b16 %v114
    %v170 = vunpack.c.l.b16 %v115
    %v171 = vpack.c.b16 %v148, %v147
    %v172 = vpack.c.b16 %v150, %v149
    %v173 = vpack.c.b16 %v152, %v151
    %v174 = vpack.c.b16 %v154, %v153
    %v175 = vpack.c.b16 %v156, %v155
    %v176 = vpack.c.b16 %v158, %v157
    %v177 = vpack.c.b16 %v160, %v159
    %v178 = vpack.c.b16 %v162, %v161
    %v179 = vpack.c.b16 %v164, %v163
    %v180 = vpack.c.b16 %v166, %v165
    %v181 = vpack.c.b16 %v168, %v167
    %v182 = vpack.c.b16 %v170, %v169
    %vm195 = vcmask 523264
    %v197 = vsel %vm195, %v91, 0
    %199 = vmatprep.subr.bf16.mxu0 0
    %200 = vmatpush1.bf16.msra.mxu0 %v171
    %201 = vmatprep.subr.bf16.mxu0 0
    %202 = vmatpush1.bf16.msra.mxu0 %v172
    %203 = vmatprep.subr.bf16.mxu0 0
    %204 = vmatpush1.bf16.msra.mxu0 %v173
    %205 = vmatprep.subr.bf16.mxu0 0
    %206 = vmatpush1.bf16.msra.mxu0 %v174
    %207 = vmatprep.subr.bf16.mxu0 0
    %208 = vmatpush1.bf16.msra.mxu0 %v175
    %209 = vmatprep.subr.bf16.mxu0 0
    %210 = vmatpush1.bf16.msra.mxu0 %v176
    %211 = vmatprep.subr.bf16.mxu0 0
    %212 = vmatpush1.bf16.msra.mxu0 %v177
    %213 = vmatprep.subr.bf16.mxu0 0
    %214 = vmatpush1.bf16.msra.mxu0 %v178
    %215 = vmatprep.subr.bf16.mxu0 0
    %216 = vmatpush1.bf16.msra.mxu0 %v179
    %217 = vmatprep.subr.bf16.mxu0 0
    %218 = vmatpush1.bf16.msra.mxu0 %v180
    %219 = vmatprep.subr.bf16.mxu0 0
    %220 = vmatpush1.bf16.msra.mxu0 %v181
    %221 = vmatprep.subr.bf16.mxu0 0
    %222 = vmatpush1.bf16.msra.mxu0 %v182
    %223 = vmatprep.subr.bf16.mxu0 0
    %224 = vmatpush1.bf16.msra.mxu0 0
    %225 = vmatprep.subr.bf16.mxu0 0
    %226 = vmatpush1.bf16.msra.mxu0 0
    %227 = vmatprep.subr.bf16.mxu0 0
    %228 = vmatpush1.bf16.msra.mxu0 0
    %229 = vmatprep.subr.bf16.mxu0 0
    %230 = vmatpush1.bf16.msra.mxu0 0
    %231 = vmatprep.mubr.bf16.mxu0 %v197
    %232 = vmatmul.mubr.bf16.gmra.mrb[0].mxu0 %v90
    %v233 = vpop.f32.mrb[0].mxu0
    %v234 = vadd.f32 %v121, %v233
    %v235 = vpop.f32.mrb[0].mxu0
    %v236 = vpop.f32.mrb[0].mxu0
    %v237 = vadd.f32 %v121, %v236
    %v238 = vpop.f32.mrb[0].mxu0
    %239 = vdwg.mxu0
    %v240 = vmax.f32 %v234, 0.0
    %v241 = vmax.f32 %v237, 0.0
    %v242 = vpack.c.bf16 %v241, %v240
    %v243 = vld [vmem:[#allocation8] sm:$0xff]
    %v244 = vld [vmem:[#allocation8 + $0x8] sm:$0xff]
    %v245 = vld [vmem:[#allocation8 + $0x10] sm:$0xff]
    %v246 = vld [vmem:[#allocation8 + $0x18] sm:$0xff]
    %v247 = vld [vmem:[#allocation8 + $0x20] sm:$0xff]
    %v248 = vld [vmem:[#allocation8 + $0x28] sm:$0xff]
    %v249 = vld [vmem:[#allocation8 + $0x30] sm:$0xff]
    %v250 = vld [vmem:[#allocation8 + $0x38] sm:$0xff]
    %v251 = vld [vmem:[#allocation8 + $0x40] sm:$0xff]
    %v252 = vld [vmem:[#allocation8 + $0x48] sm:$0xff]
    %v253 = vld [vmem:[#allocation8 + $0x50] sm:$0xff]
    %v254 = vld [vmem:[#allocation8 + $0x58] sm:$0xff]
    %v255 = vld [vmem:[#allocation8 + $0x60] sm:$0xff]
    %v256 = vld [vmem:[#allocation8 + $0x68] sm:$0xff]
    %v257 = vld [vmem:[#allocation8 + $0x70] sm:$0xff]
    %v258 = vld [vmem:[#allocation8 + $0x78] sm:$0xff]
    %v259 = vld [vmem:[#allocation10] sm:$0x3]
    %v261 = vlaneseq
    %v262 = vshrl.u32 %v261, 7
    %v263 = vsub.s32 0, %v262
    %v264 = vrot.slane %v259, %v263
    %v265 = vlaneseq
    %v266 = vshrl.u32 %v265, 7
    %v267 = vsub.s32 1, %v266
    %v268 = vrot.slane %v259, %v267
    %v287 = vunpack.c.l.b16 %v243
    %v288 = vunpack.c.h.b16 %v243
    %v289 = vunpack.c.l.b16 %v244
    %v290 = vunpack.c.h.b16 %v244
    %v291 = vunpack.c.l.b16 %v245
    %v292 = vunpack.c.h.b16 %v245
    %v293 = vunpack.c.l.b16 %v246
    %v294 = vunpack.c.h.b16 %v246
    %v295 = vunpack.c.l.b16 %v247
    %v296 = vunpack.c.h.b16 %v247
    %v297 = vunpack.c.l.b16 %v248
    %v298 = vunpack.c.h.b16 %v248
    %v299 = vunpack.c.l.b16 %v249
    %v300 = vunpack.c.h.b16 %v249
    %v301 = vunpack.c.l.b16 %v250
    %v302 = vunpack.c.h.b16 %v250
    %v303 = vunpack.c.l.b16 %v251
    %v304 = vunpack.c.h.b16 %v251
    %v305 = vunpack.c.l.b16 %v252
    %v306 = vunpack.c.h.b16 %v252
    %v307 = vunpack.c.l.b16 %v253
    %v308 = vunpack.c.h.b16 %v253
    %v309 = vunpack.c.l.b16 %v254
    %v310 = vunpack.c.h.b16 %v254
    %v311 = vunpack.c.l.b16 %v255
    %v312 = vunpack.c.h.b16 %v255
    %v313 = vunpack.c.l.b16 %v256
    %v314 = vunpack.c.h.b16 %v256
    %v315 = vunpack.c.l.b16 %v257
    %v316 = vunpack.c.h.b16 %v257
    %v317 = vunpack.c.l.b16 %v258
    %v318 = vunpack.c.h.b16 %v258
    %v319 = vpack.c.b16 %v289, %v287
    %v320 = vpack.c.b16 %v290, %v288
    %v321 = vpack.c.b16 %v293, %v291
    %v322 = vpack.c.b16 %v294, %v292
    %v323 = vpack.c.b16 %v297, %v295
    %v324 = vpack.c.b16 %v298, %v296
    %v325 = vpack.c.b16 %v301, %v299
    %v326 = vpack.c.b16 %v302, %v300
    %v327 = vpack.c.b16 %v305, %v303
    %v328 = vpack.c.b16 %v306, %v304
    %v329 = vpack.c.b16 %v309, %v307
    %v330 = vpack.c.b16 %v310, %v308
    %v331 = vpack.c.b16 %v313, %v311
    %v332 = vpack.c.b16 %v314, %v312
    %v333 = vpack.c.b16 %v317, %v315
    %v334 = vpack.c.b16 %v318, %v316
    %351 = vmatprep.subr.bf16.mxu0 %v320
    %352 = vmatpush1.bf16.msra.mxu0 %v319
    %353 = vmatprep.subr.bf16.mxu0 %v322
    %354 = vmatpush1.bf16.msra.mxu0 %v321
    %355 = vmatprep.subr.bf16.mxu0 %v324
    %356 = vmatpush1.bf16.msra.mxu0 %v323
    %357 = vmatprep.subr.bf16.mxu0 %v326
    %358 = vmatpush1.bf16.msra.mxu0 %v325
    %359 = vmatprep.subr.bf16.mxu0 %v328
    %360 = vmatpush1.bf16.msra.mxu0 %v327
    %361 = vmatprep.subr.bf16.mxu0 %v330
    %362 = vmatpush1.bf16.msra.mxu0 %v329
    %363 = vmatprep.subr.bf16.mxu0 %v332
    %364 = vmatpush1.bf16.msra.mxu0 %v331
    %365 = vmatprep.subr.bf16.mxu0 %v334
    %366 = vmatpush1.bf16.msra.mxu0 %v333
    %367 = vmatprep.subr.bf16.mxu0 0
    %368 = vmatpush1.bf16.msra.mxu0 0
    %369 = vmatprep.subr.bf16.mxu0 0
    %370 = vmatpush1.bf16.msra.mxu0 0
    %371 = vmatprep.subr.bf16.mxu0 0
    %372 = vmatpush1.bf16.msra.mxu0 0
    %373 = vmatprep.subr.bf16.mxu0 0
    %374 = vmatpush1.bf16.msra.mxu0 0
    %375 = vmatprep.subr.bf16.mxu0 0
    %376 = vmatpush1.bf16.msra.mxu0 0
    %377 = vmatprep.subr.bf16.mxu0 0
    %378 = vmatpush1.bf16.msra.mxu0 0
    %379 = vmatprep.subr.bf16.mxu0 0
    %380 = vmatpush1.bf16.msra.mxu0 0
    %381 = vmatprep.subr.bf16.mxu0 0
    %382 = vmatpush1.bf16.msra.mxu0 0
    %383 = vmatprep.mubr.bf16.mxu0 0
    %384 = vmatmul.mubr.bf16.gmra.mrb[0].mxu0 %v242
    %v385 = vpop.f32.mrb[0].mxu0
    %v386 = vadd.f32 %v264, %v385
    %v387 = vpop.f32.mrb[0].mxu0
    %v388 = vadd.f32 %v268, %v387
    %v389 = vpop.f32.mrb[0].mxu0
    %v390 = vadd.f32 %v264, %v389
    %v391 = vpop.f32.mrb[0].mxu0
    %v392 = vadd.f32 %v268, %v391
    %393 = vdwg.mxu0
    %v394 = vmax.f32 %v386, 0.0
    %v395 = vmax.f32 %v388, 0.0
    %v396 = vmax.f32 %v390, 0.0
    %v397 = vmax.f32 %v392, 0.0
    %398 = vst [vmem:[#allocation11] sm:$0xff] %v394
    %399 = vst.msk [vmem:[#allocation11 + $0x8] sm:$0xff] %vm195, %v395
    %400 = vst [vmem:[#allocation11 + $0x10] sm:$0xff] %v396
    %401 = vst.msk [vmem:[#allocation11 + $0x18] sm:$0xff] %vm195, %v397
    // Predicated region
    $region42: #{mlp_forward.1} parent=1 // pred_check
      _
    $region43: #{mlp_forward.1} parent=1 // pred_check_branch
      %403 = sbr.rel (0) target = $region45
    $region44: #{mlp_forward.1} parent=1 // pred_region
      %s405 = ssub.s32 512, 256
      %406 = vsyncadd [#allocation4], %s405
      %s407 = sshll.u32 [#allocation11], 4
      %s408 = int_to_ptr.vmem [resolvable:$true] %s407
      %413 = dma.vmem_to_hbm [thread:$0]  %s408, 256, %s5, [#allocation4], 256, 256, 16
    $region45: #{mlp_forward.1} parent=1 // pred_fallthru
      _
    // Predicated region
    $region46: #{mlp_forward.1} parent=1 // pred_check
      _
    $region47: #{mlp_forward.1} parent=1 // pred_check_branch
      %415 = sbr.rel (0) target = $region49
    $region48: #{mlp_forward.1} parent=1 // pred_region
      %416 = dma.done [#allocation4], 512
    $region49: #{mlp_forward.1} parent=1 // pred_fallthru
      _
    %417 = vsyncpa [#allocation3], 1
    %418 = vsyncpa [#allocation6], 1
    %419 = vsyncpa [#allocation9], 1
    %420 = vsyncpa [#allocation4], 1

</llo_original>
